<compile_context>
chip_gen: v6e
topology: v6e:2x2x1
jax: 0.10.0
libtpu: 0.0.40
codegen_flags: <defaults>
</compile_context>

<pallas_src>
import functools

import jax
import jax.numpy as jnp
from jax.experimental import pallas as pl
from jax.experimental.pallas import tpu as pltpu

LANES = 128
SUBLANES = 8
# Per-buffer feature block target: big enough to amortize per-step overhead on
# v5e/v6e, small enough that 2x double-buffered blocks fit v7x's 64 MiB VMEM.
TARGET_BLOCK_BYTES = 4 * 1024 * 1024


def _round_up(x, m):
    return ((x + m - 1) // m) * m


def gram_matrix(feat):
    """Plain-JAX reference of the PyTorch helper (also used for the target)."""
    B, C, H, W = feat.shape
    f = feat.reshape(B, C, H * W).astype(jnp.float32)
    g = jnp.einsum("bcn,bdn->bcd", f, f, precision=jax.lax.Precision.HIGHEST)
    return g / float(H * W)


def _gram_kernel(f_ref, g_ref, *, tiles_per_half, tile_hw, hw, needs_mask, mxu_dtype):
    """Accumulate one (batch, HW-half) partial Gram: G += F_tile @ F_tile^T."""
    h = pl.program_id(1)
    k = pl.program_id(2)

    @pl.when(k == 0)
    def _():
        g_ref[...] = jnp.zeros_like(g_ref)

    f = f_ref[...]                          # (C, tile_hw), streamed dtype
    if mxu_dtype is not None:
        f = f.astype(mxu_dtype)             # bf16 operands -> full MXU rate; acc stays f32
    if needs_mask:
        # Tail / fully-out-of-range tiles: zero every lane whose global HW index >= hw.
        t = h * tiles_per_half + k
        lane = jax.lax.broadcasted_iota(jnp.int32, f.shape, 1)
        f = jnp.where(t * tile_hw + lane < hw, f, jnp.zeros_like(f))

    # F @ F^T on the MXU (contract the lane/HW dim of both operands), f32 accumulation.
    # (Review item: if the bundle shows a per-step vxpose of the RHS, switch to
    #  pl.dot(f, f, trans_b=True); not observable here, dot_general kept.)
    g_ref[...] += jax.lax.dot_general(
        f, f, (((1,), (1,)), ((), ())), preferred_element_type=jnp.float32
    )


def style_loss_forward(x, target_gram, *, mxu_dtype=jnp.bfloat16):
    """Mirrors StyleLoss.forward: returns (input, mse(gram_matrix(input), target))."""
    B, C, H, W = x.shape
    HW = H * W

    # No padding copy and no dtype copy: stream the input exactly as it lives in HBM.
    feats = x.reshape(B, C, HW)
    itemsize = feats.dtype.itemsize
    c_sub = _round_up(C, SUBLANES)

    if HW <= LANES:
        tile_hw = HW                                     # full-dim block, no alignment needed
    else:
        max_blocks = max(1, TARGET_BLOCK_BYTES // (c_sub * itemsize * LANES))
        tile_hw = max(1, min(HW // LANES, max_blocks)) * LANES
    num_tiles = pl.cdiv(HW, tile_hw)

    # 2-way parallel split of the HW reduction (keeps both v7x TCs busy at B==1).
    num_halves = 2 if num_tiles >= 2 else 1
    tiles_per_half = pl.cdiv(num_tiles, num_halves)
    needs_mask = (num_halves * tiles_per_half * tile_hw) != HW
    last_tile = num_tiles - 1

    grid = (B, num_halves, tiles_per_half)

    kernel = functools.partial(
        _gram_kernel,
        tiles_per_half=tiles_per_half,
        tile_hw=tile_hw,
        hw=HW,
        needs_mask=needs_mask,
        mxu_dtype=mxu_dtype,
    )

    def feat_index_map(b, h, k):
        # Clamp so the (rare, fully masked) extra tile of an odd split stays in bounds.
        return (b, 0, jnp.minimum(h * tiles_per_half + k, last_tile))

    # Explicit VMEM budget: 2x double-buffered feature blocks + 2x Gram output
    # blocks + headroom (v5e's scoped default of 16 MiB is easily exceeded).
    feat_block_bytes = c_sub * tile_hw * itemsize
    gram_block_bytes = c_sub * _round_up(C, LANES) * 4
    vmem_limit = 2 * feat_block_bytes + 2 * gram_block_bytes + (4 << 20)
    vmem_limit = int(min(max(vmem_limit, 16 << 20), 100 << 20))

    partial_grams = pl.pallas_call(
        kernel,
        out_shape=jax.ShapeDtypeStruct((B, num_halves, C, C), jnp.float32),
        grid_spec=pltpu.PrefetchScalarGridSpec(
            num_scalar_prefetch=0,
            grid=grid,
            in_specs=[pl.BlockSpec((None, C, tile_hw), feat_index_map)],
            out_specs=pl.BlockSpec((None, None, C, C), lambda b, h, k: (b, h, 0, 0)),
        ),
        compiler_params=pltpu.CompilerParams(
            dimension_semantics=("parallel", "parallel", "arbitrary"),
            vmem_limit_bytes=vmem_limit,
        ),
    )(feats)

    # O(B*C^2) epilogue: combine halves, normalize by the TRUE H*W, MSE vs target.
    g = jnp.sum(partial_grams, axis=1) * (1.0 / float(HW))
    loss = jnp.mean((g - target_gram.astype(jnp.float32)) ** 2)
    # TODO(synk): PyTorch stores the scalar on `self.loss` as module state; here it
    # is returned alongside the pass-through input instead.
    return x, loss


if __name__ == "__main__":
    key = jax.random.PRNGKey(0)
    kx, kt = jax.random.split(key)

    # Small NCHW shapes consistent with the module.
    B, C, H, W = 2, 4, 16, 16
    target_feature = jax.random.normal(kt, (B, C, H, W), dtype=jnp.float32)
    x = jax.random.normal(kx, (B, C, H, W), dtype=jnp.float32)

    # __init__: target Gram computed once ("detached" -> just a constant here).
    target_G = gram_matrix(target_feature)
    ref_loss = jnp.mean((gram_matrix(x) - target_G) ** 2)

    # f32 MXU path: tight check against the f32 reference.
    out32, loss32 = style_loss_forward(x, target_G, mxu_dtype=None)
    jax.block_until_ready((out32, loss32))
    assert jnp.allclose(loss32, ref_loss, rtol=1e-3, atol=1e-6), (loss32, ref_loss)
    assert jnp.array_equal(out32, x)

    # Default fast path: bf16 MXU operands with f32 accumulation (looser tolerance).
    out, loss = style_loss_forward(x, target_G)
    jax.block_until_ready((out, loss))
    assert jnp.allclose(loss, ref_loss, rtol=2e-2, atol=1e-4), (loss, ref_loss)
    assert jnp.array_equal(out, x)  # forward returns the input unchanged

    print("KERNEL_OK")
</pallas_src>

<mosaic_0001>
module attributes {stable_mosaic.version = 11 : i64} {
  func.func @_gram_kernel(%arg0: i32, %arg1: i32, %arg2: i32, %arg3: memref<1x4x256xf32, #tpu.memory_space<vmem>>, %arg4: memref<1x1x4x4xf32, #tpu.memory_space<vmem>>) attributes {dimension_semantics = [#tpu.dimension_semantics<parallel>, #tpu.dimension_semantics<parallel>, #tpu.dimension_semantics<arbitrary>], iteration_bounds = array<i64: 2, 1, 1>, scalar_prefetch = 0 : i64, scratch_operands = 0 : i64, tpu.core_type = #tpu.core_type<tc>, window_params = [{transform_indices = @transform_0, window_bounds = array<i64: 1, 4, 256>}, {transform_indices = @transform_1, window_bounds = array<i64: 1, 1, 4, 4>}]} {
    %c0_i32 = arith.constant 0 : i32
    %0 = arith.cmpi eq, %arg2, %c0_i32 : i32
    %1 = arith.extui %0 : i1 to i32
    %c0_i32_0 = arith.constant 0 : i32
    %2 = arith.cmpi ne, %1, %c0_i32_0 : i32
    scf.if %2 {
      %cst_11 = arith.constant 0.000000e+00 : f32
      %12 = vector.broadcast %cst_11 : f32 to vector<4x4xf32>
      %c0_12 = arith.constant 0 : index
      %c0_13 = arith.constant 0 : index
      %c0_14 = arith.constant 0 : index
      %c0_15 = arith.constant 0 : index
      %13 = vector.load %arg4[%c0_12, %c0_13, %c0_14, %c0_15] : memref<1x1x4x4xf32, #tpu.memory_space<vmem>>, vector<1x1x4x4xf32>
      %14 = vector.shape_cast %13 : vector<1x1x4x4xf32> to vector<4x4xf32>
      %15 = vector.shape_cast %12 : vector<4x4xf32> to vector<1x1x4x4xf32>
      tpu.vector_store %arg4[%c0_12, %c0_13, %c0_14, %c0_15], %15 {strides = array<i32>} : memref<1x1x4x4xf32, #tpu.memory_space<vmem>>, vector<1x1x4x4xf32>,
    } else {
    }
    %c0 = arith.constant 0 : index
    %c0_1 = arith.constant 0 : index
    %c0_2 = arith.constant 0 : index
    %3 = vector.load %arg3[%c0, %c0_1, %c0_2] : memref<1x4x256xf32, #tpu.memory_space<vmem>>, vector<1x4x256xf32>
    %4 = vector.shape_cast %3 : vector<1x4x256xf32> to vector<4x256xf32>
    %c0_3 = arith.constant 0 : index
    %c0_4 = arith.constant 0 : index
    %c0_5 = arith.constant 0 : index
    %c0_6 = arith.constant 0 : index
    %5 = vector.load %arg4[%c0_3, %c0_4, %c0_5, %c0_6] : memref<1x1x4x4xf32, #tpu.memory_space<vmem>>, vector<1x1x4x4xf32>
    %6 = vector.shape_cast %5 : vector<1x1x4x4xf32> to vector<4x4xf32>
    %cst = arith.constant dense<0.000000e+00> : vector<4x4xf32>
    %7 = tpu.matmul %4, %4, %cst {dimension_numbers = #tpu.dot_dimension_numbers<[1], [1], [0], [0], [0, 0, 1, 0], [], []>} : vector<4x256xf32>, vector<4x256xf32>, vector<4x4xf32> -> vector<4x4xf32>
    %8 = arith.addf %6, %7 : vector<4x4xf32>
    %c0_7 = arith.constant 0 : index
    %c0_8 = arith.constant 0 : index
    %c0_9 = arith.constant 0 : index
    %c0_10 = arith.constant 0 : index
    %9 = vector.load %arg4[%c0_7, %c0_8, %c0_9, %c0_10] : memref<1x1x4x4xf32, #tpu.memory_space<vmem>>, vector<1x1x4x4xf32>
    %10 = vector.shape_cast %9 : vector<1x1x4x4xf32> to vector<4x4xf32>
    %11 = vector.shape_cast %8 : vector<4x4xf32> to vector<1x1x4x4xf32>
    tpu.vector_store %arg4[%c0_7, %c0_8, %c0_9, %c0_10], %11 {strides = array<i32>} : memref<1x1x4x4xf32, #tpu.memory_space<vmem>>, vector<1x1x4x4xf32>,
    return
  }
  func.func @transform_0(%arg0: i32, %arg1: i32, %arg2: i32) -> (i32, i32, i32) {
    %c1_i32 = arith.constant 1 : i32
    %0 = arith.muli %arg1, %c1_i32 : i32
    %1 = arith.addi %0, %arg2 : i32
    %c0_i32 = arith.constant 0 : i32
    %2 = arith.minsi %1, %c0_i32 : i32
    %c0_i32_0 = arith.constant 0 : i32
    %c0_i32_1 = arith.constant 0 : i32
    return %arg0, %c0_i32_0, %2 : i32, i32, i32
  }
  func.func @transform_1(%arg0: i32, %arg1: i32, %arg2: i32) -> (i32, i32, i32, i32) {
    %c0_i32 = arith.constant 0 : i32
    %c0_i32_0 = arith.constant 0 : i32
    %c0_i32_1 = arith.constant 0 : i32
    return %arg0, %arg1, %c0_i32, %c0_i32_0 : i32, i32, i32, i32
  }
}

</mosaic_0001>

<llo_original>
// kernel: tpu_custom_call.1
$region0: #{tpu_custom_call.1}
  #allocation0 [shape = 'u32[]', space=smem, size = 0x4, offset = 0x4, fixed_abs, tag = 'smem constant byte address 0x4 - core index']
  #allocation1 [shape = 'u32[144,128]{1,0:T(1,128)}', space=vmem, size = 0x12000, scoped, tag = 'internal scratch']
  %s0 = inlined_call_operand.hbm [shape: f32[2,4,256], index: 0, kind: input, shape index: {}]
  %s1 = inlined_call_operand.hbm [shape: f32[2,1,4,4], index: 1, kind: output, shape index: {}]
  %s2 = sld [smem:[#allocation0]]
  $region45: #{tpu_custom_call.1} parent=0
    _
  %s4 = ssub.s32 1, %s2
  %s5 = scalar_select 0, %s4, %s2
  $region1: #{tpu_custom_call.1} parent=0
    #allocation2 [shape = 'u8[8192]{0}', space=vmem, size = 0x2000, scoped, tag = 'input window, operand 0']
    #allocation3 [shape = 's32[2]{0}', space=sflag, size = 0x8, scoped, tag = 'scoped memory for tpu_custom_call.1']
    #allocation4 [shape = 's32[2]{0}', space=sflag, size = 0x8, scoped, tag = 'scoped memory for tpu_custom_call.1']
    #allocation5 [shape = 'u8[4096]{0}', space=vmem, size = 0x1000, scoped, tag = 'output window, operand 0']
    %6 = vsyncpa [#allocation3], 0
    %s7 = scalar_lea.sflag [#allocation3], 1
    %8 = vsyncpa %s7, 0
    %9 = vsyncpa [#allocation4], 0
    %s10 = scalar_lea.sflag [#allocation4], 1
    %11 = vsyncpa %s10, 0
    loop: start=0, step=1, limit=4
    $region2: #{tpu_custom_call.1} parent=1 // loop_pre_header
      _
    $region3: #{tpu_custom_call.1} parent=1 // loop_header
      %s13 = sphi 0, %s17
      %p14 = scmp.ge.s32.totalorder %s13, 4
      %s20 = sphi 0, %s39
      %s21 = sphi 0, %s35
      %s22 = sphi 0, %s31
      %s23 = sphi 0, %s20
      %s24 = sphi 0, %s21
      %s25 = sphi 0, %s22
      %s26 = sphi 0, %s23
      %s27 = sphi 0, %s24
      %s28 = sphi 0, %s25
      %s50 = sphi 0, %s52
      %s53 = sphi 0, %s50
      %s54 = sphi 0, %s53
      %s70 = sphi 0, %s54
      %s78 = sphi 0, %s80
      %s81 = sphi 0, %s78
      %s82 = sphi 0, %s81
      %s98 = sphi 0, %s82
    $region4: #{tpu_custom_call.1} parent=1 // loop_header_branch
      %16 = sbr.rel (%p14) target = $region8
    $region5: #{tpu_custom_call.1} parent=1 // loop_body
      %s18 = ssub.s32 %s13, 1
      %s19 = ssub.s32 %s13, 2
      %s29 = sadd.s32 1, %s22
      %p30 = scmp.ge.s32.totalorder %s29, 1
      %s31 = scalar_select %p30, 0, %s29
      %s32 = sadd.s32 1, %s21
      %s33 = scalar_select %p30, %s32, %s21
      %p34 = scmp.ge.s32.totalorder %s33, 1
      %s35 = scalar_select %p34, 0, %s33
      %s36 = sadd.s32 1, %s20
      %s37 = scalar_select %p34, %s36, %s20
      %p38 = scmp.ge.s32.totalorder %s37, 2
      %s39 = scalar_select %p38, 0, %s37
      %s40 = sadd.s32 %s21, %s22
      %p41 = scmp.lt.s32.totalorder %s40, 0
      %s42 = scalar_select %p41, %s40, 0
      %s43 = sadd.s32 %s35, %s31
      %p44 = scmp.lt.s32.totalorder %s43, 0
      %s45 = scalar_select %p44, %s43, 0
      %s46 = ssub.s32 %s20, %s39
      %s47 = ssub.s32 %s42, %s45
      %s48 = sor.u32 %s46, %s47
      %p49 = scmp.eq.s32.totalorder %s48, 0
      %s51 = sadd.s32 %s50, 1
      %s52 = scalar_select %p49, %s50, %s51
      %p55 = pneg %p49
      %p56 = scmp.eq.s32.totalorder %s13, 1
      %p57 = por %p55, %p56
      %p58 = scmp.ne.s32.totalorder %s50, %s53
      %p59 = scmp.eq.s32.totalorder %s13, 0
      %p60 = por %p58, %p59
      %p61 = scmp.ne.s32.totalorder %s50, %s53
      %p62 = scmp.eq.s32.totalorder %s18, 1
      %p63 = por %p61, %p62
      %p64 = scmp.ne.s32.totalorder %s53, %s54
      %p65 = scmp.eq.s32.totalorder %s18, 0
      %p66 = por %p64, %p65
      %p67 = scmp.ne.s32.totalorder %s53, %s54
      %p68 = scmp.eq.s32.totalorder %s19, 1
      %p69 = por %p67, %p68
      %p71 = scmp.ne.s32.totalorder %s54, %s70
      %p72 = scmp.eq.s32.totalorder %s19, 0
      %p73 = por %p71, %p72
      %s74 = ssub.s32 %s20, %s39
      %s75 = ssub.s32 %s21, %s35
      %s76 = sor.u32 %s74, %s75
      %p77 = scmp.eq.s32.totalorder %s76, 0
      %s79 = sadd.s32 %s78, 1
      %s80 = scalar_select %p77, %s78, %s79
      %p83 = pneg %p77
      %p84 = scmp.eq.s32.totalorder %s13, 1
      %p85 = por %p83, %p84
      %p86 = scmp.ne.s32.totalorder %s78, %s81
      %p87 = scmp.eq.s32.totalorder %s13, 0
      %p88 = por %p86, %p87
      %p89 = scmp.ne.s32.totalorder %s78, %s81
      %p90 = scmp.eq.s32.totalorder %s18, 1
      %p91 = por %p89, %p90
      %p92 = scmp.ne.s32.totalorder %s81, %s82
      %p93 = scmp.eq.s32.totalorder %s18, 0
      %p94 = por %p92, %p93
      %p95 = scmp.ne.s32.totalorder %s81, %s82
      %p96 = scmp.eq.s32.totalorder %s19, 1
      %p97 = por %p95, %p96
      %p99 = scmp.ne.s32.totalorder %s82, %s98
      %p100 = scmp.eq.s32.totalorder %s19, 0
      %p101 = por %p99, %p100
      %p102 = scmp.le.s32.totalorder 1, %s13
      %p103 = scmp.lt.s32.totalorder %s13, 3
      %p104 = pnand %p102, %p103
      %p105 = pneg %p104
      // Predicated region
      $region9: #{tpu_custom_call.1} parent=5 // pred_check
        _
      $region10: #{tpu_custom_call.1} parent=5 // pred_check_branch
        %107 = sbr.rel (%p104) target = $region12
      $region11: #{tpu_custom_call.1} parent=5 // pred_region
        %s108 = ssub.s32 %s13, 1
      $region12: #{tpu_custom_call.1} parent=5 // pred_fallthru
        _
      %p109 = scmp.lt.s32.totalorder %s13, 2
      // Predicated region
      $region13: #{tpu_custom_call.1} parent=5 // pred_check
        %p110 = pneg %p109
      $region14: #{tpu_custom_call.1} parent=5 // pred_check_branch
        %112 = sbr.rel (%p110) target = $region16
      $region15: #{tpu_custom_call.1} parent=5 // pred_region
        // Predicated region
        $region17: #{tpu_custom_call.1} parent=15 // pred_check
          %p113 = pneg %p60
        $region18: #{tpu_custom_call.1} parent=15 // pred_check_branch
          %115 = sbr.rel (%p113) target = $region20
        $region19: #{tpu_custom_call.1} parent=15 // pred_region
          %s116 = sand.u32 %s50, 1
          %s117 = scalar_lea.sflag [#allocation3], %s116
          %s118 = sand.u32 %s50, 1
          %s119 = smul.addr %s118, 8
          %s120 = scalar_lea.vmem [#allocation2], %s119
          %s121 = sadd.s32 %s21, %s22
          %p122 = scmp.lt.s32.totalorder %s121, 0
          %s123 = scalar_select %p122, %s121, 0
          %s124 = smul.u32 2, %s123
          %s126 = ssub.s32 128, 128
          %127 = vsyncadd %s117, %s126
          %s128 = smul.addr %s20, 2
          %s129 = sadd.s32 %s124, %s128
          %s130 = smul.addr %s129, 64
          %s131 = scalar_lea.hbm %s0, %s130
          %s133 = sshll.u32 %s120, 4
          %s134 = int_to_ptr.vmem [resolvable:$true] %s133
          %136 = dma.hbm_to_vmem [thread:$0]  %s131, 128, %s134, %s117
        $region20: #{tpu_custom_call.1} parent=15 // pred_fallthru
          _
      $region16: #{tpu_custom_call.1} parent=5 // pred_fallthru
        _
      %p137 = scmp.le.s32.totalorder 1, %s13
      %p138 = scmp.lt.s32.totalorder %s13, 3
      %p139 = pnand %p137, %p138
      %p140 = pneg %p139
      // Predicated region
      $region21: #{tpu_custom_call.1} parent=5 // pred_check
        _
      $region22: #{tpu_custom_call.1} parent=5 // pred_check_branch
        %142 = sbr.rel (%p139) target = $region24
      $region23: #{tpu_custom_call.1} parent=5 // pred_region
        %s143 = ssub.s32 %s13, 1
        %s144 = sand.u32 %s53, 1
        %s145 = scalar_lea.sflag [#allocation3], %s144
        %s146 = sand.u32 %s53, 1
        %s147 = smul.addr %s146, 8
        %s148 = scalar_lea.vmem [#allocation2], %s147
        // Predicated region
        $region25: #{tpu_custom_call.1} parent=23 // pred_check
          %p149 = pneg %p66
        $region26: #{tpu_custom_call.1} parent=23 // pred_check_branch
          %151 = sbr.rel (%p149) target = $region28
        $region27: #{tpu_custom_call.1} parent=23 // pred_region
          %152 = dma.done %s145, 128
        $region28: #{tpu_custom_call.1} parent=23 // pred_fallthru
          _
        %s153 = sand.u32 %s53, 1
        %s154 = scalar_lea.sflag [#allocation3], %s153
        %s155 = sand.u32 %s53, 1
        %s156 = smul.addr %s155, 8
        %s157 = scalar_lea.vmem [#allocation2], %s156
        %p158 = pneg %p66
        %p159 = pneg %p63
        %p160 = pneg %p94
        %p161 = pneg %p91
        %s162 = sand.u32 %s81, 1
        %s163 = scalar_lea.sflag [#allocation4], %s162
        %s164 = sand.u32 %s81, 1
        %s165 = smul.addr %s164, 4
        %s166 = scalar_lea.vmem [#allocation5], %s165
        %s167 = sadd.s32 %s24, %s25
        %p168 = scmp.lt.s32.totalorder %s167, 0
        %s169 = scalar_select %p168, %s167, 0
        %s170 = smul.u32 2, %s169
        %p171 = scmp.eq.s32.totalorder %s25, 0
        // Predicated region
        $region29: #{tpu_custom_call.1} parent=23 // pred_check
          %p172 = pneg %p171
        $region30: #{tpu_custom_call.1} parent=23 // pred_check_branch
          %174 = sbr.rel (%p172) target = $region32
        $region31: #{tpu_custom_call.1} parent=23 // pred_region
          %vm175 = vcmask 27648
          %176 = vst.msk [vmem:[%s166] sm:$0xf] %vm175, 0.0
        $region32: #{tpu_custom_call.1} parent=23 // pred_fallthru
          _
        %v177 = vld [vmem:[%s148] sm:$0xff]
        %v178 = vld [vmem:[%s166] sm:$0xf]
        %v180 = vcombine.high %v177, %v177
        %182 = vmatprep.subr.mxu0 0.0
        %183 = vmatpush1.xpose.msra.mxu0 0.0
        %184 = vmatprep.subr.mxu0 0.0
        %185 = vmatpush1.xpose.msra.mxu0 0.0
        %186 = vmatprep.subr.mxu0 0.0
        %187 = vmatpush1.xpose.msra.mxu0 0.0
        %188 = vmatprep.subr.mxu0 0.0
        %189 = vmatpush1.xpose.msra.mxu0 0.0
        %190 = vmatprep.subr.mxu0 0.0
        %191 = vmatpush1.xpose.msra.mxu0 0.0
        %192 = vmatprep.subr.mxu0 0.0
        %193 = vmatpush1.xpose.msra.mxu0 0.0
        %194 = vmatprep.subr.mxu0 0.0
        %195 = vmatpush1.xpose.msra.mxu0 0.0
        %196 = vmatprep.subr.mxu0 0.0
        %197 = vmatpush1.xpose.msra.mxu0 0.0
        %198 = vmatprep.subr.mxu0 0.0
        %199 = vmatpush1.xpose.msra.mxu0 0.0
        %200 = vmatprep.subr.mxu0 0.0
        %201 = vmatpush1.xpose.msra.mxu0 0.0
        %202 = vmatprep.subr.mxu0 0.0
        %203 = vmatpush1.xpose.msra.mxu0 0.0
        %204 = vmatprep.subr.mxu0 0.0
        %205 = vmatpush1.xpose.msra.mxu0 0.0
        %206 = vmatprep.subr.mxu0 0.0
        %207 = vmatpush1.xpose.msra.mxu0 0.0
        %208 = vmatprep.subr.mxu0 0.0
        %209 = vmatpush1.xpose.msra.mxu0 0.0
        %210 = vmatprep.subr.mxu0 0.0
        %211 = vmatpush1.xpose.msra.mxu0 0.0
        %212 = vmatprep.subr.mxu0 %v180
        %213 = vmatpush1.xpose.msra.mxu0 %v177
        %214 = vmatprep.subr.mxu0 0.0
        %215 = vmatpush2.xpose.msra.mxu0 0.0
        %216 = vmatprep.subr.mxu0 0.0
        %217 = vmatpush2.xpose.msra.mxu0 0.0
        %218 = vmatprep.subr.mxu0 0.0
        %219 = vmatpush2.xpose.msra.mxu0 0.0
        %220 = vmatprep.subr.mxu0 0.0
        %221 = vmatpush2.xpose.msra.mxu0 0.0
        %222 = vmatprep.subr.mxu0 0.0
        %223 = vmatpush2.xpose.msra.mxu0 0.0
        %224 = vmatprep.subr.mxu0 0.0
        %225 = vmatpush2.xpose.msra.mxu0 0.0
        %226 = vmatprep.subr.mxu0 0.0
        %227 = vmatpush2.xpose.msra.mxu0 0.0
        %228 = vmatprep.subr.mxu0 0.0
        %229 = vmatpush2.xpose.msra.mxu0 0.0
        %230 = vmatprep.subr.mxu0 0.0
        %231 = vmatpush2.xpose.msra.mxu0 0.0
        %232 = vmatprep.subr.mxu0 0.0
        %233 = vmatpush2.xpose.msra.mxu0 0.0
        %234 = vmatprep.subr.mxu0 0.0
        %235 = vmatpush2.xpose.msra.mxu0 0.0
        %236 = vmatprep.subr.mxu0 0.0
        %237 = vmatpush2.xpose.msra.mxu0 0.0
        %238 = vmatprep.subr.mxu0 0.0
        %239 = vmatpush2.xpose.msra.mxu0 0.0
        %240 = vmatprep.subr.mxu0 0.0
        %241 = vmatpush2.xpose.msra.mxu0 0.0
        %242 = vmatprep.subr.mxu0 0.0
        %243 = vmatpush2.xpose.msra.mxu0 0.0
        %244 = vmatprep.subr.mxu0 0.0
        %245 = vmatpush2.xpose.msra.mxu0 0.0
        %246 = vmatprep.mubr.f32.mxu0 %v180
        %247 = vmatmul.mubr.f32.gmra.mxu0 %v177
        %v248 = vpop.f32.mrf.mxu0
        %v249 = vadd.f32 0.0, %v248
        %v250 = vpop.f32.mrf.mxu0
        %251 = vdwg.mxu0
        %v252 = vadd.f32 %v178, %v249
        %vm253 = vcmask 27648
        %254 = vst.msk [vmem:[%s166] sm:$0xf] %vm253, %v252
        %s255 = sand.u32 %s81, 1
        %s256 = scalar_lea.sflag [#allocation4], %s255
        %s257 = sand.u32 %s81, 1
        %s258 = smul.addr %s257, 4
        %s259 = scalar_lea.vmem [#allocation5], %s258
        // Predicated region
        $region33: #{tpu_custom_call.1} parent=23 // pred_check
          %p260 = pneg %p91
        $region34: #{tpu_custom_call.1} parent=23 // pred_check_branch
          %262 = sbr.rel (%p260) target = $region36
        $region35: #{tpu_custom_call.1} parent=23 // pred_region
          %s264 = ssub.s32 64, 64
          %265 = vsyncadd %s256, %s264
          %s266 = sadd.s32 %s24, %s23
          %s267 = smul.addr %s266, 64
          %s268 = scalar_lea.hbm %s1, %s267
          %s270 = sshll.u32 %s259, 4
          %s271 = int_to_ptr.vmem [resolvable:$true] %s270
          %273 = dma.vmem_to_hbm [thread:$0]  %s271, 64, %s268, %s256
        $region36: #{tpu_custom_call.1} parent=23 // pred_fallthru
          _
      $region24: #{tpu_custom_call.1} parent=5 // pred_fallthru
        _
      %p274 = scmp.le.s32.totalorder 2, %s13
      // Predicated region
      $region37: #{tpu_custom_call.1} parent=5 // pred_check
        %p275 = pneg %p274
      $region38: #{tpu_custom_call.1} parent=5 // pred_check_branch
        %277 = sbr.rel (%p275) target = $region40
      $region39: #{tpu_custom_call.1} parent=5 // pred_region
        %s278 = ssub.s32 %s13, 2
        // Predicated region
        $region41: #{tpu_custom_call.1} parent=39 // pred_check
          %p279 = pneg %p97
        $region42: #{tpu_custom_call.1} parent=39 // pred_check_branch
          %281 = sbr.rel (%p279) target = $region44
        $region43: #{tpu_custom_call.1} parent=39 // pred_region
          %s282 = sand.u32 %s82, 1
          %s283 = scalar_lea.sflag [#allocation4], %s282
          %s284 = sand.u32 %s82, 1
          %s285 = smul.addr %s284, 4
          %s286 = scalar_lea.vmem [#allocation5], %s285
          %287 = dma.done %s283, 64
        $region44: #{tpu_custom_call.1} parent=39 // pred_fallthru
          _
      $region40: #{tpu_custom_call.1} parent=5 // pred_fallthru
        _
    $region6: #{tpu_custom_call.1} parent=1 // loop_footer
      %s17 = sadd.s32 1, %s13
    $region7: #{tpu_custom_call.1} parent=1 // loop_footer_branch
      %12 = sbr.rel target = $region3
    $region8: #{tpu_custom_call.1} parent=1 // loop_exit
      _
    %288 = vsyncpa [#allocation3], 1
    %s289 = scalar_lea.sflag [#allocation3], 1
    %290 = vsyncpa %s289, 1
    %291 = vsyncpa [#allocation4], 1
    %s292 = scalar_lea.sflag [#allocation4], 1
    %293 = vsyncpa %s292, 1

</llo_original>
